<compile_context>
chip_gen: v7x
topology: tpu7x:2x2x1
jax: 0.10.0
libtpu: 0.0.40
codegen_flags: <defaults>
</compile_context>

<pallas_src>
import functools

import jax
import jax.numpy as jnp
from jax import lax
from jax.experimental import pallas as pl
from jax.experimental.pallas import tpu as pltpu

_LANE = 128
# ~2 MiB of f32 per input per grid step: fast on v7x/v6e and still inside
# v5e's 16 MiB default scoped-VMEM limit with double-buffered inputs.
_TARGET_BLOCK_BYTES = 2 * 1024 * 1024


def _rmse_kernel(yt_ref, yp_ref, part_ref, acc_ref, *,
                 rows, block_rows, inner_steps, mask_rows):
    p = pl.program_id(0)   # parallel split (megacore on v7x)
    i = pl.program_id(1)   # sequential reduction axis

    @pl.when(i == 0)
    def _():
        acc_ref[...] = jnp.zeros_like(acc_ref)

    # Pure VPU elementwise work each step (sub, mul, add) -> stays DMA-bound.
    d = yt_ref[...].astype(jnp.float32) - yp_ref[...].astype(jnp.float32)
    sq = d * d
    if mask_rows:  # static Python flag: only emitted if the last block is partial
        base = (p * inner_steps + i) * block_rows
        row_ids = base + lax.broadcasted_iota(jnp.int32, sq.shape, 0)
        sq = jnp.where(row_ids < rows, sq, 0.0)
    acc_ref[...] += sq

    # One full cross-lane (XLU) reduce per split, paid once at the very end.
    @pl.when(i == inner_steps - 1)
    def _():
        total = jnp.sum(acc_ref[...])
        part_ref[...] = jnp.broadcast_to(total, part_ref.shape)


def _choose_width(n):
    for c in (2048, 1024, 512, 256, 128):
        if n % c == 0:
            return c
    return None


def rmse_loss(y_true, y_pred):
    """RMSE = sqrt(mean((y_true - y_pred)^2)) over all elements."""
    assert y_true.shape == y_pred.shape, "shapes must match (like nn.MSELoss)"
    n_elems = y_true.size

    # Free flatten; keep original dtype (kernel casts to f32 while computing).
    yt = jnp.ravel(y_true)
    yp = jnp.ravel(y_pred)

    width = _choose_width(n_elems)
    if width is None:
        # TODO(synk): rare fallback (element count not a multiple of 128) pays
        # one minimal pad copy; padded zeros contribute 0 to the squared sum.
        width = _LANE
        padded = pl.cdiv(n_elems, width) * width
        yt = jnp.pad(yt, (0, padded - n_elems))
        yp = jnp.pad(yp, (0, padded - n_elems))

    rows = yt.size // width
    # block_rows is a multiple of 8 (when < rows) or equal to the full dim,
    # satisfying the (8, 128) block-shape rule.
    block_rows = max(1, min(_TARGET_BLOCK_BYTES // (width * 4), rows))

    yt = yt.reshape(rows, width)
    yp = yp.reshape(rows, width)

    total_blocks = pl.cdiv(rows, block_rows)
    # 2-way split across TensorCores on v7x; harmless single split elsewhere.
    num_splits = 2 if (total_blocks >= 2 and total_blocks % 2 == 0) else 1
    inner_steps = total_blocks // num_splits
    mask_rows = (rows % block_rows) != 0

    kernel = functools.partial(
        _rmse_kernel,
        rows=rows,
        block_rows=block_rows,
        inner_steps=inner_steps,
        mask_rows=mask_rows,
    )

    def in_map(p, i):
        return (p * inner_steps + i, 0)

    # NOTE: pipeline_mode=pl.Buffered(3) on the input specs is optional
    # insurance if a profile ever shows exposed DMA; default double-buffering
    # already hides the copies at ~2 MiB blocks, so it is left off here.
    partials = pl.pallas_call(
        kernel,
        out_shape=jax.ShapeDtypeStruct((num_splits, 8, _LANE), jnp.float32),
        grid_spec=pltpu.PrefetchScalarGridSpec(
            num_scalar_prefetch=0,
            grid=(num_splits, inner_steps),
            in_specs=[
                pl.BlockSpec((block_rows, width), in_map),
                pl.BlockSpec((block_rows, width), in_map),
            ],
            out_specs=pl.BlockSpec((1, 8, _LANE), lambda p, i: (p, 0, 0)),
            scratch_shapes=[pltpu.VMEM((block_rows, width), jnp.float32)],
        ),
        compiler_params=pltpu.CompilerParams(
            dimension_semantics=("parallel", "arbitrary"),
        ),
    )(yt, yp)

    total = jnp.sum(partials[:, 0, 0])
    return jnp.sqrt(total / jnp.float32(n_elems))


if __name__ == "__main__":
    key = jax.random.PRNGKey(0)
    k1, k2 = jax.random.split(key)
    # Small NCHW shapes consistent with a conv-autoencoder output.
    y_true = jax.random.normal(k1, (2, 4, 16, 16), dtype=jnp.float32)
    y_pred = jax.random.normal(k2, (2, 4, 16, 16), dtype=jnp.float32)

    result = jax.block_until_ready(rmse_loss(y_true, y_pred))

    # Reference check against plain JAX.
    ref = jnp.sqrt(jnp.mean((y_true - y_pred) ** 2))
    assert jnp.allclose(result, ref, rtol=1e-5, atol=1e-6), (result, ref)

    print("KERNEL_OK")
</pallas_src>

<mosaic_0001>
module attributes {stable_mosaic.version = 11 : i64} {
  func.func @_rmse_kernel(%arg0: i32, %arg1: i32, %arg2: memref<1x2048xf32, #tpu.memory_space<vmem>>, %arg3: memref<1x2048xf32, #tpu.memory_space<vmem>>, %arg4: memref<1x8x128xf32, #tpu.memory_space<vmem>>, %arg5: memref<1x2048xf32, #tpu.memory_space<vmem>>) attributes {dimension_semantics = [#tpu.dimension_semantics<parallel>, #tpu.dimension_semantics<arbitrary>], iteration_bounds = array<i64: 1, 1>, scalar_prefetch = 0 : i64, scratch_operands = 1 : i64, tpu.core_type = #tpu.core_type<tc>, window_params = [{transform_indices = @transform_0, window_bounds = array<i64: 1, 2048>}, {transform_indices = @transform_1, window_bounds = array<i64: 1, 2048>}, {transform_indices = @transform_2, window_bounds = array<i64: 1, 8, 128>}]} {
    %c0_i32 = arith.constant 0 : i32
    %0 = arith.cmpi eq, %arg1, %c0_i32 : i32
    %1 = arith.extui %0 : i1 to i32
    %c0_i32_0 = arith.constant 0 : i32
    %2 = arith.cmpi ne, %1, %c0_i32_0 : i32
    scf.if %2 {
      %cst = arith.constant 0.000000e+00 : f32
      %13 = vector.broadcast %cst : f32 to vector<1x2048xf32>
      %c0_10 = arith.constant 0 : index
      %c0_11 = arith.constant 0 : index
      %14 = vector.load %arg5[%c0_10, %c0_11] : memref<1x2048xf32, #tpu.memory_space<vmem>>, vector<1x2048xf32>
      tpu.vector_store %arg5[%c0_10, %c0_11], %13 {strides = array<i32>} : memref<1x2048xf32, #tpu.memory_space<vmem>>, vector<1x2048xf32>,
    } else {
    }
    %c0 = arith.constant 0 : index
    %c0_1 = arith.constant 0 : index
    %3 = vector.load %arg2[%c0, %c0_1] : memref<1x2048xf32, #tpu.memory_space<vmem>>, vector<1x2048xf32>
    %c0_2 = arith.constant 0 : index
    %c0_3 = arith.constant 0 : index
    %4 = vector.load %arg3[%c0_2, %c0_3] : memref<1x2048xf32, #tpu.memory_space<vmem>>, vector<1x2048xf32>
    %5 = arith.subf %3, %4 : vector<1x2048xf32>
    %6 = arith.mulf %5, %5 : vector<1x2048xf32>
    %c0_4 = arith.constant 0 : index
    %c0_5 = arith.constant 0 : index
    %7 = vector.load %arg5[%c0_4, %c0_5] : memref<1x2048xf32, #tpu.memory_space<vmem>>, vector<1x2048xf32>
    %8 = arith.addf %7, %6 : vector<1x2048xf32>
    %c0_6 = arith.constant 0 : index
    %c0_7 = arith.constant 0 : index
    %9 = vector.load %arg5[%c0_6, %c0_7] : memref<1x2048xf32, #tpu.memory_space<vmem>>, vector<1x2048xf32>
    tpu.vector_store %arg5[%c0_6, %c0_7], %8 {strides = array<i32>} : memref<1x2048xf32, #tpu.memory_space<vmem>>, vector<1x2048xf32>,
    %c0_i32_8 = arith.constant 0 : i32
    %10 = arith.cmpi eq, %arg1, %c0_i32_8 : i32
    %11 = arith.extui %10 : i1 to i32
    %c0_i32_9 = arith.constant 0 : i32
    %12 = arith.cmpi ne, %11, %c0_i32_9 : i32
    scf.if %12 {
      %c0_10 = arith.constant 0 : index
      %c0_11 = arith.constant 0 : index
      %13 = vector.load %arg5[%c0_10, %c0_11] : memref<1x2048xf32, #tpu.memory_space<vmem>>, vector<1x2048xf32>
      %14 = vector.shape_cast %13 : vector<1x2048xf32> to vector<1x1x2048xf32>
      %cst = arith.constant dense<0.000000e+00> : vector<1xf32>
      %15 = vector.multi_reduction <add>, %14, %cst [1, 2] : vector<1x1x2048xf32> to vector<1xf32>
      %16 = vector.shape_cast %15 : vector<1xf32> to vector<1x1x1xf32>
      %17 = vector.extract %16[0, 0, 0] : f32 from vector<1x1x1xf32>
      %18 = vector.broadcast %17 : f32 to vector<1x8x128xf32>
      %c0_12 = arith.constant 0 : index
      %c0_13 = arith.constant 0 : index
      %c0_14 = arith.constant 0 : index
      %19 = vector.load %arg4[%c0_12, %c0_13, %c0_14] : memref<1x8x128xf32, #tpu.memory_space<vmem>>, vector<1x8x128xf32>
      tpu.vector_store %arg4[%c0_12, %c0_13, %c0_14], %18 {strides = array<i32>} : memref<1x8x128xf32, #tpu.memory_space<vmem>>, vector<1x8x128xf32>,
    } else {
    }
    return
  }
  func.func @transform_0(%arg0: i32, %arg1: i32) -> (i32, i32) {
    %c1_i32 = arith.constant 1 : i32
    %0 = arith.muli %arg0, %c1_i32 : i32
    %1 = arith.addi %0, %arg1 : i32
    %c0_i32 = arith.constant 0 : i32
    %c0_i32_0 = arith.constant 0 : i32
    return %1, %c0_i32 : i32, i32
  }
  func.func @transform_1(%arg0: i32, %arg1: i32) -> (i32, i32) {
    %c1_i32 = arith.constant 1 : i32
    %0 = arith.muli %arg0, %c1_i32 : i32
    %1 = arith.addi %0, %arg1 : i32
    %c0_i32 = arith.constant 0 : i32
    %c0_i32_0 = arith.constant 0 : i32
    return %1, %c0_i32 : i32, i32
  }
  func.func @transform_2(%arg0: i32, %arg1: i32) -> (i32, i32, i32) {
    %c0_i32 = arith.constant 0 : i32
    %c0_i32_0 = arith.constant 0 : i32
    %c0_i32_1 = arith.constant 0 : i32
    return %arg0, %c0_i32, %c0_i32_0 : i32, i32, i32
  }
}

</mosaic_0001>

<llo_original>
// kernel: tpu_custom_call.1
$region0: #{tpu_custom_call.1}
  #allocation0 [shape = 'u32[]', space=smem, size = 0x4, offset = 0x4, fixed_abs, tag = 'smem constant byte address 0x4 - core index']
  #allocation1 [shape = 'u32[144,128]{1,0:T(1,128)}', space=vmem, size = 0x12000, scoped, tag = 'internal scratch']
  #allocation2 [shape = 'f32[1,2048]{1,0:T(1,128)}', space=vmem, size = 0x2000, scoped, tag = 'scratch operand']
  %s0 = inlined_call_operand.hbm [shape: f32[1,2048], index: 0, kind: input, shape index: {}]
  %s1 = inlined_call_operand.hbm [shape: f32[1,2048], index: 1, kind: input, shape index: {}]
  %s2 = inlined_call_operand.hbm [shape: f32[1,8,128], index: 2, kind: output, shape index: {}]
  %s3 = sld [smem:[#allocation0]]
  $region34: #{tpu_custom_call.1} parent=0
    _
  %s5 = ssub.s32 1, %s3
  %s6 = scalar_select 0, %s5, %s3
  $region1: #{tpu_custom_call.1} parent=0
    #allocation3 [shape = 'u8[8192]{0}', space=vmem, size = 0x2000, scoped, tag = 'input window, operand 0, single buffered']
    #allocation4 [shape = 's32[1]{0}', space=sflag, size = 0x4, scoped, tag = 'scoped memory for tpu_custom_call.1']
    #allocation5 [shape = 's32[1]{0}', space=sflag, size = 0x4, scoped, tag = 'scoped memory for tpu_custom_call.1']
    #allocation6 [shape = 'u8[8192]{0}', space=vmem, size = 0x2000, scoped, tag = 'input window, operand 1, single buffered']
    #allocation7 [shape = 's32[1]{0}', space=sflag, size = 0x4, scoped, tag = 'scoped memory for tpu_custom_call.1']
    #allocation8 [shape = 'u8[4096]{0}', space=vmem, size = 0x1000, scoped, tag = 'output window, operand 0, single buffered']
    %7 = vsyncpa [#allocation4], 0
    %8 = vsyncpa [#allocation7], 0
    %9 = vsyncpa [#allocation5], 0
    // Predicated region
    $region2: #{tpu_custom_call.1} parent=1 // pred_check
      _
    $region3: #{tpu_custom_call.1} parent=1 // pred_check_branch
      %11 = sbr.rel (0) target = $region5
    $region4: #{tpu_custom_call.1} parent=1 // pred_region
      %s12 = sadd.s32 0, 0
      %s14 = ssub.s32 256, 256
      %15 = vsyncadd [#allocation4], %s14
      %s16 = smul.addr %s12, 16
      %s17 = smul.addr %s16, 16
      %s18 = scalar_lea.hbm %s0, %s17
      %s20 = sshll.u32 [#allocation3], 4
      %s21 = int_to_ptr.vmem [resolvable:$true] %s20
      %23 = dma.hbm_to_vmem [thread:$0]  %s18, 256, %s21, [#allocation4]
    $region5: #{tpu_custom_call.1} parent=1 // pred_fallthru
      _
    // Predicated region
    $region6: #{tpu_custom_call.1} parent=1 // pred_check
      _
    $region7: #{tpu_custom_call.1} parent=1 // pred_check_branch
      %25 = sbr.rel (0) target = $region9
    $region8: #{tpu_custom_call.1} parent=1 // pred_region
      %s26 = sadd.s32 0, 0
      %s28 = ssub.s32 256, 256
      %29 = vsyncadd [#allocation7], %s28
      %s30 = smul.addr %s26, 16
      %s31 = smul.addr %s30, 16
      %s32 = scalar_lea.hbm %s1, %s31
      %s34 = sshll.u32 [#allocation6], 4
      %s35 = int_to_ptr.vmem [resolvable:$true] %s34
      %37 = dma.hbm_to_vmem [thread:$0]  %s32, 256, %s35, [#allocation7]
    $region9: #{tpu_custom_call.1} parent=1 // pred_fallthru
      _
    // Predicated region
    $region10: #{tpu_custom_call.1} parent=1 // pred_check
      _
    $region11: #{tpu_custom_call.1} parent=1 // pred_check_branch
      %39 = sbr.rel (0) target = $region13
    $region12: #{tpu_custom_call.1} parent=1 // pred_region
      %40 = dma.done [#allocation4], 256
    $region13: #{tpu_custom_call.1} parent=1 // pred_fallthru
      _
    // Predicated region
    $region14: #{tpu_custom_call.1} parent=1 // pred_check
      _
    $region15: #{tpu_custom_call.1} parent=1 // pred_check_branch
      %42 = sbr.rel (0) target = $region17
    $region16: #{tpu_custom_call.1} parent=1 // pred_region
      %43 = dma.done [#allocation7], 256
    $region17: #{tpu_custom_call.1} parent=1 // pred_fallthru
      _
    %s44 = sadd.s32 0, 0
    %s45 = sadd.s32 0, 0
    %p46 = scmp.eq.s32.totalorder 0, 0
    // Predicated region
    $region18: #{tpu_custom_call.1} parent=1 // pred_check
      %p47 = pneg %p46
    $region19: #{tpu_custom_call.1} parent=1 // pred_check_branch
      %49 = sbr.rel (%p47) target = $region21
    $region20: #{tpu_custom_call.1} parent=1 // pred_region
      %50 = vst [vmem:[#allocation2] sm:$0xff] 0.0
      %51 = vst [vmem:[#allocation2 + $0x8] sm:$0xff] 0.0
    $region21: #{tpu_custom_call.1} parent=1 // pred_fallthru
      _
    %v52 = vld [vmem:[#allocation3] sm:$0xff]
    %v53 = vld [vmem:[#allocation3 + $0x8] sm:$0xff]
    %v54 = vld [vmem:[#allocation6] sm:$0xff]
    %v55 = vld [vmem:[#allocation6 + $0x8] sm:$0xff]
    %v56 = vsub.f32 %v52, %v54
    %v57 = vsub.f32 %v53, %v55
    %v58 = vmul.f32 %v56, %v56
    %v59 = vmul.f32 %v57, %v57
    %v60 = vld [vmem:[#allocation2] sm:$0xff]
    %v61 = vld [vmem:[#allocation2 + $0x8] sm:$0xff]
    %v62 = vadd.f32 %v60, %v58
    %v63 = vadd.f32 %v61, %v59
    %64 = vst [vmem:[#allocation2] sm:$0xff] %v62
    %65 = vst [vmem:[#allocation2 + $0x8] sm:$0xff] %v63
    // Predicated region
    $region22: #{tpu_custom_call.1} parent=1 // pred_check
      %p66 = pneg %p46
    $region23: #{tpu_custom_call.1} parent=1 // pred_check_branch
      %68 = sbr.rel (%p66) target = $region25
    $region24: #{tpu_custom_call.1} parent=1 // pred_region
      %v69 = vld [vmem:[#allocation2] sm:$0xff]
      %v70 = vld [vmem:[#allocation2 + $0x8] sm:$0xff]
      %v73 = vlaneseq
      %v74 = vshrl.u32 %v73, 7
      %v75 = vsub.s32 0, %v74
      %v76 = vrot.slane %v69, %v75
      %v77 = vlaneseq
      %v78 = vshrl.u32 %v77, 7
      %v79 = vsub.s32 1, %v78
      %v80 = vrot.slane %v69, %v79
      %v81 = vlaneseq
      %v82 = vshrl.u32 %v81, 7
      %v83 = vsub.s32 2, %v82
      %v84 = vrot.slane %v69, %v83
      %v85 = vlaneseq
      %v86 = vshrl.u32 %v85, 7
      %v87 = vsub.s32 3, %v86
      %v88 = vrot.slane %v69, %v87
      %v89 = vlaneseq
      %v90 = vshrl.u32 %v89, 7
      %v91 = vsub.s32 4, %v90
      %v92 = vrot.slane %v69, %v91
      %v93 = vlaneseq
      %v94 = vshrl.u32 %v93, 7
      %v95 = vsub.s32 5, %v94
      %v96 = vrot.slane %v69, %v95
      %v97 = vlaneseq
      %v98 = vshrl.u32 %v97, 7
      %v99 = vsub.s32 6, %v98
      %v100 = vrot.slane %v69, %v99
      %v101 = vlaneseq
      %v102 = vshrl.u32 %v101, 7
      %v103 = vsub.s32 7, %v102
      %v104 = vrot.slane %v69, %v103
      %v105 = vlaneseq
      %v106 = vshrl.u32 %v105, 7
      %v107 = vsub.s32 0, %v106
      %v108 = vrot.slane %v70, %v107
      %v109 = vlaneseq
      %v110 = vshrl.u32 %v109, 7
      %v111 = vsub.s32 1, %v110
      %v112 = vrot.slane %v70, %v111
      %v113 = vlaneseq
      %v114 = vshrl.u32 %v113, 7
      %v115 = vsub.s32 2, %v114
      %v116 = vrot.slane %v70, %v115
      %v117 = vlaneseq
      %v118 = vshrl.u32 %v117, 7
      %v119 = vsub.s32 3, %v118
      %v120 = vrot.slane %v70, %v119
      %v121 = vlaneseq
      %v122 = vshrl.u32 %v121, 7
      %v123 = vsub.s32 4, %v122
      %v124 = vrot.slane %v70, %v123
      %v125 = vlaneseq
      %v126 = vshrl.u32 %v125, 7
      %v127 = vsub.s32 5, %v126
      %v128 = vrot.slane %v70, %v127
      %v129 = vlaneseq
      %v130 = vshrl.u32 %v129, 7
      %v131 = vsub.s32 6, %v130
      %v132 = vrot.slane %v70, %v131
      %v133 = vlaneseq
      %v134 = vshrl.u32 %v133, 7
      %v135 = vsub.s32 7, %v134
      %v136 = vrot.slane %v70, %v135
      %vm153 = vcmask 1040384
      %v154 = vsel %vm153, %v76, 0.0
      %v155 = vsel %vm153, %v80, 0.0
      %v156 = vadd.f32 %v154, %v155
      %v157 = vsel %vm153, %v84, 0.0
      %v158 = vadd.f32 %v156, %v157
      %v159 = vsel %vm153, %v88, 0.0
      %v160 = vadd.f32 %v158, %v159
      %v161 = vsel %vm153, %v92, 0.0
      %v162 = vadd.f32 %v160, %v161
      %v163 = vsel %vm153, %v96, 0.0
      %v164 = vadd.f32 %v162, %v163
      %v165 = vsel %vm153, %v100, 0.0
      %v166 = vadd.f32 %v164, %v165
      %v167 = vsel %vm153, %v104, 0.0
      %v168 = vadd.f32 %v166, %v167
      %v169 = vsel %vm153, %v108, 0.0
      %v170 = vadd.f32 %v168, %v169
      %v171 = vsel %vm153, %v112, 0.0
      %v172 = vadd.f32 %v170, %v171
      %v173 = vsel %vm153, %v116, 0.0
      %v174 = vadd.f32 %v172, %v173
      %v175 = vsel %vm153, %v120, 0.0
      %v176 = vadd.f32 %v174, %v175
      %v177 = vsel %vm153, %v124, 0.0
      %v178 = vadd.f32 %v176, %v177
      %v179 = vsel %vm153, %v128, 0.0
      %v180 = vadd.f32 %v178, %v179
      %v181 = vsel %vm153, %v132, 0.0
      %v182 = vadd.f32 %v180, %v181
      %v183 = vsel %vm153, %v136, 0.0
      %v184 = vadd.f32 %v182, %v183
      %185 = vadd.xlane.f32.xlu0 %v184
      %v186 = vpop.xlane.xlu0 %185
      %v187 = vrot.slane %v186, 4
      %v188 = vadd.f32 %v186, %v187
      %v189 = vrot.slane %v188, 2
      %v190 = vadd.f32 %v188, %v189
      %v191 = vrot.slane %v190, 1
      %v192 = vadd.f32 %v190, %v191
      %s193 = vtos %v192
      %v194 = vstv %s193
      %195 = vst [vmem:[#allocation8] sm:$0xff] %v194
    $region25: #{tpu_custom_call.1} parent=1 // pred_fallthru
      _
    // Predicated region
    $region26: #{tpu_custom_call.1} parent=1 // pred_check
      _
    $region27: #{tpu_custom_call.1} parent=1 // pred_check_branch
      %197 = sbr.rel (0) target = $region29
    $region28: #{tpu_custom_call.1} parent=1 // pred_region
      %s199 = ssub.s32 128, 128
      %200 = vsyncadd [#allocation5], %s199
      %s202 = sshll.u32 [#allocation8], 4
      %s203 = int_to_ptr.vmem [resolvable:$true] %s202
      %205 = dma.vmem_to_hbm [thread:$0]  %s203, 128, %s2, [#allocation5]
    $region29: #{tpu_custom_call.1} parent=1 // pred_fallthru
      _
    // Predicated region
    $region30: #{tpu_custom_call.1} parent=1 // pred_check
      _
    $region31: #{tpu_custom_call.1} parent=1 // pred_check_branch
      %207 = sbr.rel (0) target = $region33
    $region32: #{tpu_custom_call.1} parent=1 // pred_region
      %208 = dma.done [#allocation5], 128
    $region33: #{tpu_custom_call.1} parent=1 // pred_fallthru
      _
    %209 = vsyncpa [#allocation4], 1
    %210 = vsyncpa [#allocation7], 1
    %211 = vsyncpa [#allocation5], 1

</llo_original>
